<compile_context>
chip_gen: v6e
topology: v6e:2x2x1
jax: 0.10.0
libtpu: 0.0.40
codegen_flags: <defaults>
</compile_context>

<pallas_src>
import jax
import jax.numpy as jnp
from jax.experimental import pallas as pl
from jax.experimental.pallas import tpu as pltpu


def _make_qkv_kernel(out_dims):
    """Kernel: one fused matmul  y = W_all @ x + b_all, then static row-slices
    of the accumulator are written to the per-output refs (each lane-dense)."""
    out_dims = tuple(int(d) for d in out_dims)

    def kernel(x_ref, w_ref, b_ref, *out_refs):
        x = x_ref[0]            # (C, TL)   native dtype
        w = w_ref[...]          # (Dtot, C) native dtype
        # Native-dtype operands, f32 accumulation on the MXU.
        y = jnp.dot(w, x, preferred_element_type=jnp.float32)      # (Dtot, TL)
        y = y + b_ref[...].astype(jnp.float32)                     # (Dtot, 1) bcast
        start = 0
        for o_ref, d in zip(out_refs, out_dims):
            o_ref[0] = y[start:start + d].astype(o_ref.dtype)
            start += d

    return kernel


def _pick_tile(hw, c, dtot, itemsize):
    """Largest lane tile (multiple of 128, capped at 4096) whose double-buffered
    input + output footprint fits a conservative VMEM budget (v7x-safe), then
    re-balanced so every grid step carries near-equal lane work."""
    budget = 12 * 1024 * 1024              # bytes for pipelined x + q/k/v buffers
    per_lane = 2 * (c + dtot) * itemsize   # double-buffered in + out columns
    tl_cap = max(128, (budget // per_lane) // 128 * 128)
    tl_cap = min(4096, tl_cap)
    if hw <= tl_cap:
        return hw                           # full dim is always a legal block size
    n_tiles = pl.cdiv(hw, tl_cap)
    tl = pl.cdiv(hw, n_tiles)               # balance work across grid steps
    tl = pl.cdiv(tl, 128) * 128             # keep lane-multiple alignment
    return tl


def _project(x3, w_all, b_all, out_dims):
    """x3: (N, C, HW).  w_all: (Dtot, C), b_all: (Dtot,).
    Returns one (N, d, HW) array per entry of out_dims (sum(out_dims) == Dtot)."""
    n, c, hw = x3.shape
    out_dims = tuple(int(d) for d in out_dims)
    dtot = sum(out_dims)
    out_dtype = x3.dtype
    itemsize = max(jnp.dtype(x3.dtype).itemsize, 4)   # f32 accumulator-ish bound

    tl = _pick_tile(hw, c, dtot, itemsize)
    grid = (n, pl.cdiv(hw, tl))

    b2 = b_all.reshape(dtot, 1)

    flops = 2 * n * hw * c * dtot
    bytes_accessed = int(
        n * c * hw * jnp.dtype(x3.dtype).itemsize
        + w_all.size * jnp.dtype(w_all.dtype).itemsize
        + b_all.size * jnp.dtype(b_all.dtype).itemsize
        + n * hw * dtot * jnp.dtype(out_dtype).itemsize)

    outs = pl.pallas_call(
        _make_qkv_kernel(out_dims),
        out_shape=tuple(jax.ShapeDtypeStruct((n, d, hw), out_dtype)
                        for d in out_dims),
        grid_spec=pltpu.PrefetchScalarGridSpec(
            num_scalar_prefetch=0,
            grid=grid,
            in_specs=[
                pl.BlockSpec((1, c, tl), lambda b, l: (b, 0, l)),     # x
                pl.BlockSpec((dtot, c), lambda b, l: (0, 0)),         # W_all (resident)
                pl.BlockSpec((dtot, 1), lambda b, l: (0, 0)),         # b_all (resident)
            ],
            out_specs=tuple(
                pl.BlockSpec((1, d, tl), lambda b, l: (b, 0, l))
                for d in out_dims),
        ),
        compiler_params=pltpu.CompilerParams(
            dimension_semantics=("parallel", "parallel"),
            vmem_limit_bytes=32 * 1024 * 1024),
        cost_estimate=pl.CostEstimate(flops=flops, transcendentals=0,
                                      bytes_accessed=bytes_accessed),
    )(x3, w_all, b2)
    return list(outs)


def conv_qkv(x, params, attn_kv=None):
    """x: (N, C, H, W).  Returns (q, k, v), each NCHW, matching ConvQKV.forward."""
    wq, bq, wk, bk, wv, bv = params
    n, c, h, w = x.shape
    dqk = wq.shape[0]
    dv = wv.shape[0]

    x3 = x.reshape(n, c, h * w)          # free contiguous reshape, layout kept NCHW

    if attn_kv is None:
        # Common path: single activation stream, one fused matmul for q|k|v.
        w_all = jnp.concatenate([wq, wk, wv], axis=0)
        b_all = jnp.concatenate([bq, bk, bv], axis=0)
        q3, k3, v3 = _project(x3, w_all, b_all, (dqk, dqk, dv))
        nk, hk, wk_ = n, h, w
    else:
        nk, ck, hk, wk_ = attn_kv.shape
        kv3 = attn_kv.reshape(nk, ck, hk * wk_)
        (q3,) = _project(x3, wq, bq, (dqk,))
        k3, v3 = _project(kv3,
                          jnp.concatenate([wk, wv], axis=0),
                          jnp.concatenate([bk, bv], axis=0),
                          (dqk, dv))

    q = q3.reshape(n, dqk, h, w)
    k = k3.reshape(nk, dqk, hk, wk_)
    v = v3.reshape(nk, dv, hk, wk_)
    return q, k, v


def init_conv_qkv_params(key, input_dim, heads=4, dim_head=8, qk_frac=1.0,
                         dtype=jnp.float32):
    """Deterministic parameter init.  1x1 conv weight (out_C, in_C, 1, 1) is
    stored directly as (out_C, in_C) — same layout the kernel consumes."""
    inner_dim = dim_head * heads
    inner_dim_qk = int(qk_frac * dim_head) * heads
    ks = jax.random.split(key, 6)
    scale = 1.0 / jnp.sqrt(input_dim)
    wq = (jax.random.normal(ks[0], (inner_dim_qk, input_dim)) * scale).astype(dtype)
    bq = (jax.random.normal(ks[1], (inner_dim_qk,)) * scale).astype(dtype)
    wk = (jax.random.normal(ks[2], (inner_dim_qk, input_dim)) * scale).astype(dtype)
    bk = (jax.random.normal(ks[3], (inner_dim_qk,)) * scale).astype(dtype)
    wv = (jax.random.normal(ks[4], (inner_dim, input_dim)) * scale).astype(dtype)
    bv = (jax.random.normal(ks[5], (inner_dim,)) * scale).astype(dtype)
    return (wq, bq, wk, bk, wv, bv)


def _reference_qkv(x, params, attn_kv=None):
    """Pure-JAX reference of the 1x1-conv QKV projection for validation."""
    wq, bq, wk, bk, wv, bv = params
    attn_kv = x if attn_kv is None else attn_kv
    q = jnp.einsum('dc,nchw->ndhw', wq, x) + bq[None, :, None, None]
    k = jnp.einsum('dc,nchw->ndhw', wk, attn_kv) + bk[None, :, None, None]
    v = jnp.einsum('dc,nchw->ndhw', wv, attn_kv) + bv[None, :, None, None]
    return q, k, v


if __name__ == "__main__":
    key = jax.random.PRNGKey(0)
    kx, kkv, kp = jax.random.split(key, 3)

    # Small shapes: batch=2, channels=4, spatial=16x16, heads=4, dim_head=8.
    N, C, H, W = 2, 4, 16, 16
    x = jax.random.normal(kx, (N, C, H, W), dtype=jnp.float32)
    kv_in = jax.random.normal(kkv, (N, C, H, W), dtype=jnp.float32)

    params = init_conv_qkv_params(kp, input_dim=C, heads=4, dim_head=8)

    # Fused common path (attn_kv=None).
    q, k, v = conv_qkv(x, params)
    jax.block_until_ready((q, k, v))
    q_ref, k_ref, v_ref = _reference_qkv(x, params)
    assert q.shape == q_ref.shape and k.shape == k_ref.shape and v.shape == v_ref.shape
    assert jnp.allclose(q, q_ref, atol=1e-5, rtol=1e-5)
    assert jnp.allclose(k, k_ref, atol=1e-5, rtol=1e-5)
    assert jnp.allclose(v, v_ref, atol=1e-5, rtol=1e-5)

    # Explicit attn_kv path.
    q2, k2, v2 = conv_qkv(x, params, attn_kv=kv_in)
    jax.block_until_ready((q2, k2, v2))
    q2_ref, k2_ref, v2_ref = _reference_qkv(x, params, attn_kv=kv_in)
    assert jnp.allclose(q2, q2_ref, atol=1e-5, rtol=1e-5)
    assert jnp.allclose(k2, k2_ref, atol=1e-5, rtol=1e-5)
    assert jnp.allclose(v2, v2_ref, atol=1e-5, rtol=1e-5)

    print("KERNEL_OK")
</pallas_src>

<mosaic_0001>
module attributes {stable_mosaic.version = 11 : i64} {
  func.func @kernel(%arg0: i32, %arg1: i32, %arg2: memref<1x4x256xf32, #tpu.memory_space<vmem>>, %arg3: memref<96x4xf32, #tpu.memory_space<vmem>>, %arg4: memref<96x1xf32, #tpu.memory_space<vmem>>, %arg5: memref<1x32x256xf32, #tpu.memory_space<vmem>>, %arg6: memref<1x32x256xf32, #tpu.memory_space<vmem>>, %arg7: memref<1x32x256xf32, #tpu.memory_space<vmem>>) attributes {dimension_semantics = [#tpu.dimension_semantics<parallel>, #tpu.dimension_semantics<parallel>], iteration_bounds = array<i64: 2, 1>, scalar_prefetch = 0 : i64, scratch_operands = 0 : i64, tpu.core_type = #tpu.core_type<tc>, window_params = [{transform_indices = @transform_0, window_bounds = array<i64: 1, 4, 256>}, {pipeline_mode = #tpu.pipeline_mode<synchronous>, transform_indices = @transform_1, window_bounds = array<i64: 96, 4>}, {pipeline_mode = #tpu.pipeline_mode<synchronous>, transform_indices = @transform_2, window_bounds = array<i64: 96, 1>}, {transform_indices = @transform_3, window_bounds = array<i64: 1, 32, 256>}, {transform_indices = @transform_4, window_bounds = array<i64: 1, 32, 256>}, {transform_indices = @transform_5, window_bounds = array<i64: 1, 32, 256>}]} {
    %c0 = arith.constant 0 : index
    %c0_0 = arith.constant 0 : index
    %c0_1 = arith.constant 0 : index
    %0 = vector.load %arg2[%c0, %c0_0, %c0_1] : memref<1x4x256xf32, #tpu.memory_space<vmem>>, vector<1x4x256xf32>
    %1 = vector.shape_cast %0 : vector<1x4x256xf32> to vector<4x256xf32>
    %c0_2 = arith.constant 0 : index
    %c0_3 = arith.constant 0 : index
    %2 = vector.load %arg3[%c0_2, %c0_3] : memref<96x4xf32, #tpu.memory_space<vmem>>, vector<96x4xf32>
    %cst = arith.constant dense<0.000000e+00> : vector<96x256xf32>
    %3 = tpu.matmul %2, %1, %cst {dimension_numbers = #tpu.dot_dimension_numbers<[1], [0], [0], [1], [0, 0, 1, 1], [], []>} : vector<96x4xf32>, vector<4x256xf32>, vector<96x256xf32> -> vector<96x256xf32>
    %c0_4 = arith.constant 0 : index
    %c0_5 = arith.constant 0 : index
    %4 = vector.load %arg4[%c0_4, %c0_5] : memref<96x1xf32, #tpu.memory_space<vmem>>, vector<96x1xf32>
    %5 = vector.broadcast %4 : vector<96x1xf32> to vector<96x256xf32>
    %6 = arith.addf %3, %5 : vector<96x256xf32>
    %7 = vector.extract_strided_slice %6 {offsets = [0, 0], sizes = [32, 256], strides = [1, 1]} : vector<96x256xf32> to vector<32x256xf32>
    %c0_6 = arith.constant 0 : index
    %c0_7 = arith.constant 0 : index
    %c0_8 = arith.constant 0 : index
    %8 = vector.load %arg5[%c0_6, %c0_7, %c0_8] : memref<1x32x256xf32, #tpu.memory_space<vmem>>, vector<1x32x256xf32>
    %9 = vector.shape_cast %8 : vector<1x32x256xf32> to vector<32x256xf32>
    %10 = vector.shape_cast %7 : vector<32x256xf32> to vector<1x32x256xf32>
    tpu.vector_store %arg5[%c0_6, %c0_7, %c0_8], %10 {strides = array<i32>} : memref<1x32x256xf32, #tpu.memory_space<vmem>>, vector<1x32x256xf32>,
    %11 = vector.extract_strided_slice %6 {offsets = [32, 0], sizes = [32, 256], strides = [1, 1]} : vector<96x256xf32> to vector<32x256xf32>
    %c0_9 = arith.constant 0 : index
    %c0_10 = arith.constant 0 : index
    %c0_11 = arith.constant 0 : index
    %12 = vector.load %arg6[%c0_9, %c0_10, %c0_11] : memref<1x32x256xf32, #tpu.memory_space<vmem>>, vector<1x32x256xf32>
    %13 = vector.shape_cast %12 : vector<1x32x256xf32> to vector<32x256xf32>
    %14 = vector.shape_cast %11 : vector<32x256xf32> to vector<1x32x256xf32>
    tpu.vector_store %arg6[%c0_9, %c0_10, %c0_11], %14 {strides = array<i32>} : memref<1x32x256xf32, #tpu.memory_space<vmem>>, vector<1x32x256xf32>,
    %15 = vector.extract_strided_slice %6 {offsets = [64, 0], sizes = [32, 256], strides = [1, 1]} : vector<96x256xf32> to vector<32x256xf32>
    %c0_12 = arith.constant 0 : index
    %c0_13 = arith.constant 0 : index
    %c0_14 = arith.constant 0 : index
    %16 = vector.load %arg7[%c0_12, %c0_13, %c0_14] : memref<1x32x256xf32, #tpu.memory_space<vmem>>, vector<1x32x256xf32>
    %17 = vector.shape_cast %16 : vector<1x32x256xf32> to vector<32x256xf32>
    %18 = vector.shape_cast %15 : vector<32x256xf32> to vector<1x32x256xf32>
    tpu.vector_store %arg7[%c0_12, %c0_13, %c0_14], %18 {strides = array<i32>} : memref<1x32x256xf32, #tpu.memory_space<vmem>>, vector<1x32x256xf32>,
    return
  }
  func.func @transform_0(%arg0: i32, %arg1: i32) -> (i32, i32, i32) {
    %c0_i32 = arith.constant 0 : i32
    %c0_i32_0 = arith.constant 0 : i32
    return %arg0, %c0_i32, %arg1 : i32, i32, i32
  }
  func.func @transform_1(%arg0: i32, %arg1: i32) -> (i32, i32) {
    %c0_i32 = arith.constant 0 : i32
    %c0_i32_0 = arith.constant 0 : i32
    %c0_i32_1 = arith.constant 0 : i32
    return %c0_i32, %c0_i32_0 : i32, i32
  }
  func.func @transform_2(%arg0: i32, %arg1: i32) -> (i32, i32) {
    %c0_i32 = arith.constant 0 : i32
    %c0_i32_0 = arith.constant 0 : i32
    %c0_i32_1 = arith.constant 0 : i32
    return %c0_i32, %c0_i32_0 : i32, i32
  }
  func.func @transform_3(%arg0: i32, %arg1: i32) -> (i32, i32, i32) {
    %c0_i32 = arith.constant 0 : i32
    %c0_i32_0 = arith.constant 0 : i32
    return %arg0, %c0_i32, %arg1 : i32, i32, i32
  }
  func.func @transform_4(%arg0: i32, %arg1: i32) -> (i32, i32, i32) {
    %c0_i32 = arith.constant 0 : i32
    %c0_i32_0 = arith.constant 0 : i32
    return %arg0, %c0_i32, %arg1 : i32, i32, i32
  }
  func.func @transform_5(%arg0: i32, %arg1: i32) -> (i32, i32, i32) {
    %c0_i32 = arith.constant 0 : i32
    %c0_i32_0 = arith.constant 0 : i32
    return %arg0, %c0_i32, %arg1 : i32, i32, i32
  }
}

</mosaic_0001>

<llo_original>
// kernel: tpu_custom_call.1
$region0: #{tpu_custom_call.1}
  #allocation0 [shape = 'u32[]', space=smem, size = 0x4, offset = 0x4, fixed_abs, tag = 'smem constant byte address 0x4 - core index']
  #allocation1 [shape = 'u32[144,128]{1,0:T(1,128)}', space=vmem, size = 0x12000, scoped, tag = 'internal scratch']
  %s0 = inlined_call_operand.vmem [shape: f32[2,4,256], index: 0, kind: input, shape index: {}]
  %s1 = inlined_call_operand.vmem [shape: f32[96,4], index: 1, kind: input, shape index: {}]
  %s2 = inlined_call_operand.vmem [shape: f32[96,1], index: 2, kind: input, shape index: {}]
  %s3 = inlined_call_operand.hbm [shape: f32[2,32,256], index: 3, kind: output, shape index: {0}]
  %s4 = inlined_call_operand.hbm [shape: f32[2,32,256], index: 4, kind: output, shape index: {1}]
  %s5 = inlined_call_operand.hbm [shape: f32[2,32,256], index: 5, kind: output, shape index: {2}]
  %6 = xla_tuple %s3, %s4, %s5
  %s7 = sld [smem:[#allocation0]]
  $region61: #{tpu_custom_call.1} parent=0
    _
  %s9 = ssub.s32 1, %s7
  %s10 = scalar_select 0, %s9, %s7
  $region1: #{tpu_custom_call.1} parent=0
    #allocation2 [shape = 'u8[65536]{0}', space=vmem, size = 0x10000, scoped, tag = 'output window, operand 0']
    #allocation3 [shape = 's32[2]{0}', space=sflag, size = 0x8, scoped, tag = 'scoped memory for tpu_custom_call.1']
    #allocation4 [shape = 'u8[65536]{0}', space=vmem, size = 0x10000, scoped, tag = 'output window, operand 1']
    #allocation5 [shape = 's32[2]{0}', space=sflag, size = 0x8, scoped, tag = 'scoped memory for tpu_custom_call.1']
    #allocation6 [shape = 'u8[65536]{0}', space=vmem, size = 0x10000, scoped, tag = 'output window, operand 2']
    %11 = vsyncpa [#allocation3], 0
    %s12 = scalar_lea.sflag [#allocation3], 1
    %13 = vsyncpa %s12, 0
    %14 = vsyncpa [#allocation5], 0
    %s15 = scalar_lea.sflag [#allocation5], 1
    %16 = vsyncpa %s15, 0
    loop: start=0, step=1, limit=4
    $region2: #{tpu_custom_call.1} parent=1 // loop_pre_header
      _
    $region3: #{tpu_custom_call.1} parent=1 // loop_header
      %s18 = sphi 0, %s22
      %p19 = scmp.ge.s32.totalorder %s18, 4
      %s25 = sphi 0, %s37
      %s26 = sphi 0, %s33
      %s27 = sphi 0, %s25
      %s28 = sphi 0, %s26
      %s29 = sphi 0, %s27
      %s30 = sphi 0, %s28
      %s42 = sphi 0, %s44
      %s45 = sphi 0, %s42
      %s46 = sphi 0, %s45
      %s62 = sphi 0, %s46
      %s66 = sphi 0, %s66
      %s68 = sphi 0, %s66
      %s69 = sphi 0, %s68
      %s83 = sphi 0, %s69
      %s87 = sphi 0, %s87
      %s89 = sphi 0, %s87
      %s90 = sphi 0, %s89
      %s104 = sphi 0, %s90
      %s112 = sphi 0, %s114
      %s115 = sphi 0, %s112
      %s116 = sphi 0, %s115
      %s132 = sphi 0, %s116
      %s140 = sphi 0, %s142
      %s143 = sphi 0, %s140
      %s144 = sphi 0, %s143
      %s160 = sphi 0, %s144
      %s168 = sphi 0, %s170
      %s171 = sphi 0, %s168
      %s172 = sphi 0, %s171
      %s188 = sphi 0, %s172
    $region4: #{tpu_custom_call.1} parent=1 // loop_header_branch
      %21 = sbr.rel (%p19) target = $region8
    $region5: #{tpu_custom_call.1} parent=1 // loop_body
      %s23 = ssub.s32 %s18, 1
      %s24 = ssub.s32 %s18, 2
      %s31 = sadd.s32 1, %s26
      %p32 = scmp.ge.s32.totalorder %s31, 1
      %s33 = scalar_select %p32, 0, %s31
      %s34 = sadd.s32 1, %s25
      %s35 = scalar_select %p32, %s34, %s25
      %p36 = scmp.ge.s32.totalorder %s35, 2
      %s37 = scalar_select %p36, 0, %s35
      %s38 = ssub.s32 %s25, %s37
      %s39 = ssub.s32 %s26, %s33
      %s40 = sor.u32 %s38, %s39
      %p41 = scmp.eq.s32.totalorder %s40, 0
      %s43 = sadd.s32 %s42, 1
      %s44 = scalar_select %p41, %s42, %s43
      %p47 = pneg %p41
      %p48 = scmp.eq.s32.totalorder %s18, 1
      %p49 = por %p47, %p48
      %p50 = scmp.ne.s32.totalorder %s42, %s45
      %p51 = scmp.eq.s32.totalorder %s18, 0
      %p52 = por %p50, %p51
      %p53 = scmp.ne.s32.totalorder %s42, %s45
      %p54 = scmp.eq.s32.totalorder %s23, 1
      %p55 = por %p53, %p54
      %p56 = scmp.ne.s32.totalorder %s45, %s46
      %p57 = scmp.eq.s32.totalorder %s23, 0
      %p58 = por %p56, %p57
      %p59 = scmp.ne.s32.totalorder %s45, %s46
      %p60 = scmp.eq.s32.totalorder %s24, 1
      %p61 = por %p59, %p60
      %p63 = scmp.ne.s32.totalorder %s46, %s62
      %p64 = scmp.eq.s32.totalorder %s24, 0
      %p65 = por %p63, %p64
      %s67 = sadd.s32 %s66, 1
      %p70 = scmp.eq.s32.totalorder %s18, 1
      %p71 = scmp.ne.s32.totalorder %s66, %s68
      %p72 = scmp.eq.s32.totalorder %s18, 0
      %p73 = por %p71, %p72
      %p74 = scmp.ne.s32.totalorder %s66, %s68
      %p75 = scmp.eq.s32.totalorder %s23, 1
      %p76 = por %p74, %p75
      %p77 = scmp.ne.s32.totalorder %s68, %s69
      %p78 = scmp.eq.s32.totalorder %s23, 0
      %p79 = por %p77, %p78
      %p80 = scmp.ne.s32.totalorder %s68, %s69
      %p81 = scmp.eq.s32.totalorder %s24, 1
      %p82 = por %p80, %p81
      %p84 = scmp.ne.s32.totalorder %s69, %s83
      %p85 = scmp.eq.s32.totalorder %s24, 0
      %p86 = por %p84, %p85
      %s88 = sadd.s32 %s87, 1
      %p91 = scmp.eq.s32.totalorder %s18, 1
      %p92 = scmp.ne.s32.totalorder %s87, %s89
      %p93 = scmp.eq.s32.totalorder %s18, 0
      %p94 = por %p92, %p93
      %p95 = scmp.ne.s32.totalorder %s87, %s89
      %p96 = scmp.eq.s32.totalorder %s23, 1
      %p97 = por %p95, %p96
      %p98 = scmp.ne.s32.totalorder %s89, %s90
      %p99 = scmp.eq.s32.totalorder %s23, 0
      %p100 = por %p98, %p99
      %p101 = scmp.ne.s32.totalorder %s89, %s90
      %p102 = scmp.eq.s32.totalorder %s24, 1
      %p103 = por %p101, %p102
      %p105 = scmp.ne.s32.totalorder %s90, %s104
      %p106 = scmp.eq.s32.totalorder %s24, 0
      %p107 = por %p105, %p106
      %s108 = ssub.s32 %s25, %s37
      %s109 = ssub.s32 %s26, %s33
      %s110 = sor.u32 %s108, %s109
      %p111 = scmp.eq.s32.totalorder %s110, 0
      %s113 = sadd.s32 %s112, 1
      %s114 = scalar_select %p111, %s112, %s113
      %p117 = pneg %p111
      %p118 = scmp.eq.s32.totalorder %s18, 1
      %p119 = por %p117, %p118
      %p120 = scmp.ne.s32.totalorder %s112, %s115
      %p121 = scmp.eq.s32.totalorder %s18, 0
      %p122 = por %p120, %p121
      %p123 = scmp.ne.s32.totalorder %s112, %s115
      %p124 = scmp.eq.s32.totalorder %s23, 1
      %p125 = por %p123, %p124
      %p126 = scmp.ne.s32.totalorder %s115, %s116
      %p127 = scmp.eq.s32.totalorder %s23, 0
      %p128 = por %p126, %p127
      %p129 = scmp.ne.s32.totalorder %s115, %s116
      %p130 = scmp.eq.s32.totalorder %s24, 1
      %p131 = por %p129, %p130
      %p133 = scmp.ne.s32.totalorder %s116, %s132
      %p134 = scmp.eq.s32.totalorder %s24, 0
      %p135 = por %p133, %p134
      %s136 = ssub.s32 %s25, %s37
      %s137 = ssub.s32 %s26, %s33
      %s138 = sor.u32 %s136, %s137
      %p139 = scmp.eq.s32.totalorder %s138, 0
      %s141 = sadd.s32 %s140, 1
      %s142 = scalar_select %p139, %s140, %s141
      %p145 = pneg %p139
      %p146 = scmp.eq.s32.totalorder %s18, 1
      %p147 = por %p145, %p146
      %p148 = scmp.ne.s32.totalorder %s140, %s143
      %p149 = scmp.eq.s32.totalorder %s18, 0
      %p150 = por %p148, %p149
      %p151 = scmp.ne.s32.totalorder %s140, %s143
      %p152 = scmp.eq.s32.totalorder %s23, 1
      %p153 = por %p151, %p152
      %p154 = scmp.ne.s32.totalorder %s143, %s144
      %p155 = scmp.eq.s32.totalorder %s23, 0
      %p156 = por %p154, %p155
      %p157 = scmp.ne.s32.totalorder %s143, %s144
      %p158 = scmp.eq.s32.totalorder %s24, 1
      %p159 = por %p157, %p158
      %p161 = scmp.ne.s32.totalorder %s144, %s160
      %p162 = scmp.eq.s32.totalorder %s24, 0
      %p163 = por %p161, %p162
      %s164 = ssub.s32 %s25, %s37
      %s165 = ssub.s32 %s26, %s33
      %s166 = sor.u32 %s164, %s165
      %p167 = scmp.eq.s32.totalorder %s166, 0
      %s169 = sadd.s32 %s168, 1
      %s170 = scalar_select %p167, %s168, %s169
      %p173 = pneg %p167
      %p174 = scmp.eq.s32.totalorder %s18, 1
      %p175 = por %p173, %p174
      %p176 = scmp.ne.s32.totalorder %s168, %s171
      %p177 = scmp.eq.s32.totalorder %s18, 0
      %p178 = por %p176, %p177
      %p179 = scmp.ne.s32.totalorder %s168, %s171
      %p180 = scmp.eq.s32.totalorder %s23, 1
      %p181 = por %p179, %p180
      %p182 = scmp.ne.s32.totalorder %s171, %s172
      %p183 = scmp.eq.s32.totalorder %s23, 0
      %p184 = por %p182, %p183
      %p185 = scmp.ne.s32.totalorder %s171, %s172
      %p186 = scmp.eq.s32.totalorder %s24, 1
      %p187 = por %p185, %p186
      %p189 = scmp.ne.s32.totalorder %s172, %s188
      %p190 = scmp.eq.s32.totalorder %s24, 0
      %p191 = por %p189, %p190
      %p192 = scmp.le.s32.totalorder 1, %s18
      %p193 = scmp.lt.s32.totalorder %s18, 3
      %p194 = pnand %p192, %p193
      %p195 = pneg %p194
      // Predicated region
      $region9: #{tpu_custom_call.1} parent=5 // pred_check
        _
      $region10: #{tpu_custom_call.1} parent=5 // pred_check_branch
        %197 = sbr.rel (%p194) target = $region12
      $region11: #{tpu_custom_call.1} parent=5 // pred_region
        %s198 = ssub.s32 %s18, 1
        // Predicated region
        $region13: #{tpu_custom_call.1} parent=11 // pred_check
          %p199 = pneg %p79
        $region14: #{tpu_custom_call.1} parent=11 // pred_check_branch
          %201 = sbr.rel (%p199) target = $region16
        $region15: #{tpu_custom_call.1} parent=11 // pred_region
          _
        $region16: #{tpu_custom_call.1} parent=11 // pred_fallthru
          _
        // Predicated region
        $region17: #{tpu_custom_call.1} parent=11 // pred_check
          %p202 = pneg %p100
        $region18: #{tpu_custom_call.1} parent=11 // pred_check_branch
          %204 = sbr.rel (%p202) target = $region20
        $region19: #{tpu_custom_call.1} parent=11 // pred_region
          _
        $region20: #{tpu_custom_call.1} parent=11 // pred_fallthru
          _
      $region12: #{tpu_custom_call.1} parent=5 // pred_fallthru
        _
      %p205 = scmp.lt.s32.totalorder %s18, 2
      // Predicated region
      $region21: #{tpu_custom_call.1} parent=5 // pred_check
        %p206 = pneg %p205
      $region22: #{tpu_custom_call.1} parent=5 // pred_check_branch
        %208 = sbr.rel (%p206) target = $region24
      $region23: #{tpu_custom_call.1} parent=5 // pred_region
        // Predicated region
        $region25: #{tpu_custom_call.1} parent=23 // pred_check
          %p209 = pneg %p52
        $region26: #{tpu_custom_call.1} parent=23 // pred_check_branch
          %211 = sbr.rel (%p209) target = $region28
        $region27: #{tpu_custom_call.1} parent=23 // pred_region
          %s212 = smul.u32 2, %s26
          %p213 = scmp.lt.s32.totalorder %s25, 1
          %s214 = scalar_select %p213, %s25, 1
          %p215 = scmp.lt.s32.totalorder %s212, 1
          %s216 = scalar_select %p215, %s212, 1
          %s217 = smul.addr %s214, 2
          %s218 = sadd.s32 %s216, %s217
          %s219 = smul.addr %s218, 4
          %s220 = scalar_lea.vmem %s0, %s219
          %s221 = smul.u32 2, %s26
        $region28: #{tpu_custom_call.1} parent=23 // pred_fallthru
          _
      $region24: #{tpu_custom_call.1} parent=5 // pred_fallthru
        _
      %p222 = scmp.le.s32.totalorder 1, %s18
      %p223 = scmp.lt.s32.totalorder %s18, 3
      %p224 = pnand %p222, %p223
      %p225 = pneg %p224
      // Predicated region
      $region29: #{tpu_custom_call.1} parent=5 // pred_check
        _
      $region30: #{tpu_custom_call.1} parent=5 // pred_check_branch
        %227 = sbr.rel (%p224) target = $region32
      $region31: #{tpu_custom_call.1} parent=5 // pred_region
        %s228 = ssub.s32 %s18, 1
        %s229 = smul.u32 2, %s28
        %p230 = scmp.lt.s32.totalorder %s27, 1
        %s231 = scalar_select %p230, %s27, 1
        %p232 = scmp.lt.s32.totalorder %s229, 1
        %s233 = scalar_select %p232, %s229, 1
        %s234 = smul.addr %s231, 2
        %s235 = sadd.s32 %s233, %s234
        %s236 = smul.addr %s235, 4
        %s237 = scalar_lea.vmem %s0, %s236
        %p238 = pneg %p58
        %p239 = pneg %p55
        %p240 = pneg %p79
        %p241 = pneg %p76
        %p242 = pneg %p100
        %p243 = pneg %p97
        %p244 = pneg %p128
        %p245 = pneg %p125
        %s246 = sand.u32 %s115, 1
        %s247 = scalar_lea.sflag [#allocation3], %s246
        %s248 = sand.u32 %s115, 1
        %s249 = smul.addr %s248, 64
        %s250 = scalar_lea.vmem [#allocation2], %s249
        %p251 = pneg %p156
        %p252 = pneg %p153
        %s253 = sand.u32 %s23, 1
        %s254 = scalar_lea.sflag [#allocation5], %s253
        %s255 = sand.u32 %s143, 1
        %s256 = smul.addr %s255, 64
        %s257 = scalar_lea.vmem [#allocation4], %s256
        %p258 = pneg %p184
        %p259 = pneg %p181
        %s260 = sand.u32 %s23, 1
        %s261 = scalar_lea.sflag [#allocation5], %s260
        %s262 = sand.u32 %s171, 1
        %s263 = smul.addr %s262, 64
        %s264 = scalar_lea.vmem [#allocation6], %s263
        %s265 = smul.u32 2, %s28
        %p266 = scmp.lt.s32.totalorder %s27, 1
        %s267 = scalar_select %p266, %s27, 1
        %p268 = scmp.lt.s32.totalorder %s265, 1
        %s269 = scalar_select %p268, %s265, 1
        %s270 = smul.addr %s267, 2
        %s271 = sadd.s32 %s269, %s270
        %s272 = smul.addr %s271, 4
        %s273 = scalar_lea.vmem %s0, %s272
        %s274 = smul.u32 2, %s28
        %s275 = smul.u32 2, %s28
        %s276 = smul.u32 2, %s28
        %s277 = smul.u32 2, %s28
        %v278 = vld [vmem:[%s273] sm:$0xff]
        %v279 = vld [vmem:[%s1] sm:$0xff]
        %v280 = vld [vmem:[%s1 + $0x8] sm:$0xff]
        %v281 = vld [vmem:[%s1 + $0x10] sm:$0xff]
        %v282 = vld [vmem:[%s1 + $0x18] sm:$0xff]
        %v283 = vld [vmem:[%s1 + $0x20] sm:$0xff]
        %v284 = vld [vmem:[%s1 + $0x28] sm:$0xff]
        %v285 = vld [vmem:[%s1 + $0x30] sm:$0xff]
        %v286 = vld [vmem:[%s1 + $0x38] sm:$0xff]
        %v287 = vld [vmem:[%s1 + $0x40] sm:$0xff]
        %v288 = vld [vmem:[%s1 + $0x48] sm:$0xff]
        %v289 = vld [vmem:[%s1 + $0x50] sm:$0xff]
        %v290 = vld [vmem:[%s1 + $0x58] sm:$0xff]
        %v291 = vld [vmem:[%s2] sm:$0xff]
        %v292 = vld [vmem:[%s2 + $0x8] sm:$0xff]
        %v293 = vld [vmem:[%s2 + $0x10] sm:$0xff]
        %v294 = vld [vmem:[%s2 + $0x18] sm:$0xff]
        %v295 = vld [vmem:[%s2 + $0x20] sm:$0xff]
        %v296 = vld [vmem:[%s2 + $0x28] sm:$0xff]
        %v297 = vld [vmem:[%s2 + $0x30] sm:$0xff]
        %v298 = vld [vmem:[%s2 + $0x38] sm:$0xff]
        %v299 = vld [vmem:[%s2 + $0x40] sm:$0xff]
        %v300 = vld [vmem:[%s2 + $0x48] sm:$0xff]
        %v301 = vld [vmem:[%s2 + $0x50] sm:$0xff]
        %v302 = vld [vmem:[%s2 + $0x58] sm:$0xff]
        %304 = vset.pattern.permute.xlu0 0
        %305 = vperm.xlu0 %304, %v291
        %v306 = vpop.permute.xlu0 %305
        %309 = vset.pattern.permute.xlu0 0
        %310 = vperm.xlu0 %309, %v292
        %v311 = vpop.permute.xlu0 %310
        %314 = vset.pattern.permute.xlu0 0
        %315 = vperm.xlu0 %314, %v293
        %v316 = vpop.permute.xlu0 %315
        %319 = vset.pattern.permute.xlu0 0
        %320 = vperm.xlu0 %319, %v294
        %v321 = vpop.permute.xlu0 %320
        %324 = vset.pattern.permute.xlu0 0
        %325 = vperm.xlu0 %324, %v295
        %v326 = vpop.permute.xlu0 %325
        %329 = vset.pattern.permute.xlu0 0
        %330 = vperm.xlu0 %329, %v296
        %v331 = vpop.permute.xlu0 %330
        %334 = vset.pattern.permute.xlu0 0
        %335 = vperm.xlu0 %334, %v297
        %v336 = vpop.permute.xlu0 %335
        %339 = vset.pattern.permute.xlu0 0
        %340 = vperm.xlu0 %339, %v298
        %v341 = vpop.permute.xlu0 %340
        %344 = vset.pattern.permute.xlu0 0
        %345 = vperm.xlu0 %344, %v299
        %v346 = vpop.permute.xlu0 %345
        %349 = vset.pattern.permute.xlu0 0
        %350 = vperm.xlu0 %349, %v300
        %v351 = vpop.permute.xlu0 %350
        %354 = vset.pattern.permute.xlu0 0
        %355 = vperm.xlu0 %354, %v301
        %v356 = vpop.permute.xlu0 %355
        %359 = vset.pattern.permute.xlu0 0
        %360 = vperm.xlu0 %359, %v302
        %v361 = vpop.permute.xlu0 %360
        %v364 = vcombine.high %v278, %v278
        %vm365 = vcmask 31744
        %v367 = vsel %vm365, %v279, 0
        %v370 = vsel %vm365, %v280, 0
        %v373 = vsel %vm365, %v281, 0
        %v376 = vsel %vm365, %v282, 0
        %v379 = vsel %vm365, %v283, 0
        %v382 = vsel %vm365, %v284, 0
        %v385 = vsel %vm365, %v285, 0
        %v388 = vsel %vm365, %v286, 0
        %v391 = vsel %vm365, %v287, 0
        %v394 = vsel %vm365, %v288, 0
        %v397 = vsel %vm365, %v289, 0
        %v400 = vsel %vm365, %v290, 0
        %vm402 = vcmask 1043456
        %v403 = vsel %vm402, %v278, 0
        %v405 = vsel %vm402, %v364, 0
        %407 = vmatprep.subr.mxu0 0.0
        %408 = vmatpush1.msra.mxu0 0.0
        %409 = vmatprep.subr.mxu0 0.0
        %410 = vmatpush1.msra.mxu0 0.0
        %411 = vmatprep.subr.mxu0 0.0
        %412 = vmatpush1.msra.mxu0 0.0
        %413 = vmatprep.subr.mxu0 0.0
        %414 = vmatpush1.msra.mxu0 0.0
        %415 = vmatprep.subr.mxu0 0.0
        %416 = vmatpush1.msra.mxu0 0.0
        %417 = vmatprep.subr.mxu0 0.0
        %418 = vmatpush1.msra.mxu0 0.0
        %419 = vmatprep.subr.mxu0 0.0
        %420 = vmatpush1.msra.mxu0 0.0
        %421 = vmatprep.subr.mxu0 0.0
        %422 = vmatpush1.msra.mxu0 0.0
        %423 = vmatprep.subr.mxu0 0.0
        %424 = vmatpush1.msra.mxu0 0.0
        %425 = vmatprep.subr.mxu0 0.0
        %426 = vmatpush1.msra.mxu0 0.0
        %427 = vmatprep.subr.mxu0 0.0
        %428 = vmatpush1.msra.mxu0 0.0
        %429 = vmatprep.subr.mxu0 0.0
        %430 = vmatpush1.msra.mxu0 0.0
        %431 = vmatprep.subr.mxu0 0.0
        %432 = vmatpush1.msra.mxu0 0.0
        %433 = vmatprep.subr.mxu0 0.0
        %434 = vmatpush1.msra.mxu0 0.0
        %435 = vmatprep.subr.mxu0 0.0
        %436 = vmatpush1.msra.mxu0 0.0
        %437 = vmatprep.subr.mxu0 %v405
        %438 = vmatpush1.msra.mxu0 %v403
        %439 = vmatprep.subr.mxu0 0.0
        %440 = vmatpush2.msra.mxu0 0.0
        %441 = vmatprep.subr.mxu0 0.0
        %442 = vmatpush2.msra.mxu0 0.0
        %443 = vmatprep.subr.mxu0 0.0
        %444 = vmatpush2.msra.mxu0 0.0
        %445 = vmatprep.subr.mxu0 0.0
        %446 = vmatpush2.msra.mxu0 0.0
        %447 = vmatprep.subr.mxu0 0.0
        %448 = vmatpush2.msra.mxu0 0.0
        %449 = vmatprep.subr.mxu0 0.0
        %450 = vmatpush2.msra.mxu0 0.0
        %451 = vmatprep.subr.mxu0 0.0
        %452 = vmatpush2.msra.mxu0 0.0
        %453 = vmatprep.subr.mxu0 0.0
        %454 = vmatpush2.msra.mxu0 0.0
        %455 = vmatprep.subr.mxu0 0.0
        %456 = vmatpush2.msra.mxu0 0.0
        %457 = vmatprep.subr.mxu0 0.0
        %458 = vmatpush2.msra.mxu0 0.0
        %459 = vmatprep.subr.mxu0 0.0
        %460 = vmatpush2.msra.mxu0 0.0
        %461 = vmatprep.subr.mxu0 0.0
        %462 = vmatpush2.msra.mxu0 0.0
        %463 = vmatprep.subr.mxu0 0.0
        %464 = vmatpush2.msra.mxu0 0.0
        %465 = vmatprep.subr.mxu0 0.0
        %466 = vmatpush2.msra.mxu0 0.0
        %467 = vmatprep.subr.mxu0 0.0
        %468 = vmatpush2.msra.mxu0 0.0
        %469 = vmatprep.subr.mxu0 0.0
        %470 = vmatpush2.msra.mxu0 0.0
        %471 = vmatprep.mubr.f32.mxu0 0.0
        %472 = vmatmul.mubr.f32.gmra.mxu0 %v367
        %v473 = vpop.f32.mrf.mxu0
        %v474 = vadd.f32 %v306, %v473
        %v475 = vpop.f32.mrf.mxu0
        %v476 = vadd.f32 %v306, %v475
        %477 = vmatprep.mubr.f32.mxu0 0.0
        %478 = vmatmul.mubr.f32.gmra.mxu0 %v370
        %v479 = vpop.f32.mrf.mxu0
        %v480 = vadd.f32 %v311, %v479
        %v481 = vpop.f32.mrf.mxu0
        %v482 = vadd.f32 %v311, %v481
        %483 = vmatprep.mubr.f32.mxu0 0.0
        %484 = vmatmul.mubr.f32.gmra.mxu0 %v373
        %v485 = vpop.f32.mrf.mxu0
        %v486 = vadd.f32 %v316, %v485
        %v487 = vpop.f32.mrf.mxu0
        %v488 = vadd.f32 %v316, %v487
        %489 = vmatprep.mubr.f32.mxu0 0.0
        %490 = vmatmul.mubr.f32.gmra.mxu0 %v376
        %v491 = vpop.f32.mrf.mxu0
        %v492 = vadd.f32 %v321, %v491
        %v493 = vpop.f32.mrf.mxu0
        %v494 = vadd.f32 %v321, %v493
        %495 = vmatprep.mubr.f32.mxu0 0.0
        %496 = vmatmul.mubr.f32.gmra.mxu0 %v379
        %v497 = vpop.f32.mrf.mxu0
        %v498 = vadd.f32 %v326, %v497
        %v499 = vpop.f32.mrf.mxu0
        %v500 = vadd.f32 %v326, %v499
        %501 = vmatprep.mubr.f32.mxu0 0.0
        %502 = vmatmul.mubr.f32.gmra.mxu0 %v382
        %v503 = vpop.f32.mrf.mxu0
        %v504 = vadd.f32 %v331, %v503
        %v505 = vpop.f32.mrf.mxu0
        %v506 = vadd.f32 %v331, %v505
        %507 = vmatprep.mubr.f32.mxu0 0.0
        %508 = vmatmul.mubr.f32.gmra.mxu0 %v385
        %v509 = vpop.f32.mrf.mxu0
        %v510 = vadd.f32 %v336, %v509
        %v511 = vpop.f32.mrf.mxu0
        %v512 = vadd.f32 %v336, %v511
        %513 = vmatprep.mubr.f32.mxu0 0.0
        %514 = vmatmul.mubr.f32.gmra.mxu0 %v388
        %v515 = vpop.f32.mrf.mxu0
        %v516 = vadd.f32 %v341, %v515
        %v517 = vpop.f32.mrf.mxu0
        %v518 = vadd.f32 %v341, %v517
        %519 = vmatprep.mubr.f32.mxu0 0.0
        %520 = vmatmul.mubr.f32.gmra.mxu0 %v391
        %v521 = vpop.f32.mrf.mxu0
        %v522 = vadd.f32 %v346, %v521
        %v523 = vpop.f32.mrf.mxu0
        %v524 = vadd.f32 %v346, %v523
        %525 = vmatprep.mubr.f32.mxu0 0.0
        %526 = vmatmul.mubr.f32.gmra.mxu0 %v394
        %v527 = vpop.f32.mrf.mxu0
        %v528 = vadd.f32 %v351, %v527
        %v529 = vpop.f32.mrf.mxu0
        %v530 = vadd.f32 %v351, %v529
        %531 = vmatprep.mubr.f32.mxu0 0.0
        %532 = vmatmul.mubr.f32.gmra.mxu0 %v397
        %v533 = vpop.f32.mrf.mxu0
        %v534 = vadd.f32 %v356, %v533
        %v535 = vpop.f32.mrf.mxu0
        %v536 = vadd.f32 %v356, %v535
        %537 = vmatprep.mubr.f32.mxu0 0.0
        %538 = vmatmul.mubr.f32.gmra.mxu0 %v400
        %v539 = vpop.f32.mrf.mxu0
        %v540 = vadd.f32 %v361, %v539
        %v541 = vpop.f32.mrf.mxu0
        %v542 = vadd.f32 %v361, %v541
        %543 = vdwg.mxu0
        %544 = vst [vmem:[%s250] sm:$0xff] %v474
        %545 = vst [vmem:[%s250 + $0x8] sm:$0xff] %v476
        %546 = vst [vmem:[%s250 + $0x10] sm:$0xff] %v480
        %547 = vst [vmem:[%s250 + $0x18] sm:$0xff] %v482
        %548 = vst [vmem:[%s250 + $0x20] sm:$0xff] %v486
        %549 = vst [vmem:[%s250 + $0x28] sm:$0xff] %v488
        %550 = vst [vmem:[%s250 + $0x30] sm:$0xff] %v492
        %551 = vst [vmem:[%s250 + $0x38] sm:$0xff] %v494
        %552 = vst [vmem:[%s257] sm:$0xff] %v498
        %553 = vst [vmem:[%s257 + $0x8] sm:$0xff] %v500
        %554 = vst [vmem:[%s257 + $0x10] sm:$0xff] %v504
        %555 = vst [vmem:[%s257 + $0x18] sm:$0xff] %v506
        %556 = vst [vmem:[%s257 + $0x20] sm:$0xff] %v510
        %557 = vst [vmem:[%s257 + $0x28] sm:$0xff] %v512
        %558 = vst [vmem:[%s257 + $0x30] sm:$0xff] %v516
        %559 = vst [vmem:[%s257 + $0x38] sm:$0xff] %v518
        %560 = vst [vmem:[%s264] sm:$0xff] %v522
        %561 = vst [vmem:[%s264 + $0x8] sm:$0xff] %v524
        %562 = vst [vmem:[%s264 + $0x10] sm:$0xff] %v528
        %563 = vst [vmem:[%s264 + $0x18] sm:$0xff] %v530
        %564 = vst [vmem:[%s264 + $0x20] sm:$0xff] %v534
        %565 = vst [vmem:[%s264 + $0x28] sm:$0xff] %v536
        %566 = vst [vmem:[%s264 + $0x30] sm:$0xff] %v540
        %567 = vst [vmem:[%s264 + $0x38] sm:$0xff] %v542
        %s568 = sand.u32 %s115, 1
        %s569 = scalar_lea.sflag [#allocation3], %s568
        %s570 = sand.u32 %s115, 1
        %s571 = smul.addr %s570, 64
        %s572 = scalar_lea.vmem [#allocation2], %s571
        %s573 = sand.u32 %s23, 1
        %s574 = scalar_lea.sflag [#allocation5], %s573
        %s575 = sand.u32 %s143, 1
        %s576 = smul.addr %s575, 64
        %s577 = scalar_lea.vmem [#allocation4], %s576
        %s578 = sand.u32 %s23, 1
        %s579 = scalar_lea.sflag [#allocation5], %s578
        %s580 = sand.u32 %s171, 1
        %s581 = smul.addr %s580, 64
        %s582 = scalar_lea.vmem [#allocation6], %s581
        // Predicated region
        $region33: #{tpu_custom_call.1} parent=31 // pred_check
          %p583 = pneg %p125
        $region34: #{tpu_custom_call.1} parent=31 // pred_check_branch
          %585 = sbr.rel (%p583) target = $region36
        $region35: #{tpu_custom_call.1} parent=31 // pred_region
          %s586 = smul.u32 2, %s28
          %s588 = ssub.s32 1024, 1024
          %589 = vsyncadd %s569, %s588
          %s590 = smul.addr %s27, 8
          %s591 = sadd.s32 %s586, %s590
          %s592 = smul.addr %s591, 128
          %s593 = scalar_lea.hbm %s3, %s592
          %s594 = sshll.u32 %s572, 4
          %s595 = int_to_ptr.vmem [resolvable:$true] %s594
          %600 = dma.vmem_to_hbm [thread:$0]  %s595, 1024, %s593, %s569, 256, 256, 16
        $region36: #{tpu_custom_call.1} parent=31 // pred_fallthru
          _
        // Predicated region
        $region37: #{tpu_custom_call.1} parent=31 // pred_check
          %p601 = pneg %p153
        $region38: #{tpu_custom_call.1} parent=31 // pred_check_branch
          %603 = sbr.rel (%p601) target = $region40
        $region39: #{tpu_custom_call.1} parent=31 // pred_region
          %s604 = smul.u32 2, %s28
          %s606 = ssub.s32 1024, 1024
          %607 = vsyncadd %s574, %s606
          %s608 = smul.addr %s27, 8
          %s609 = sadd.s32 %s604, %s608
          %s610 = smul.addr %s609, 128
          %s611 = scalar_lea.hbm %s4, %s610
          %s612 = sshll.u32 %s577, 4
          %s613 = int_to_ptr.vmem [resolvable:$true] %s612
          %618 = dma.vmem_to_hbm [thread:$0]  %s613, 1024, %s611, %s574, 256, 256, 16
        $region40: #{tpu_custom_call.1} parent=31 // pred_fallthru
          _
        // Predicated region
        $region41: #{tpu_custom_call.1} parent=31 // pred_check
          %p619 = pneg %p181
        $region42: #{tpu_custom_call.1} parent=31 // pred_check_branch
          %621 = sbr.rel (%p619) target = $region44
        $region43: #{tpu_custom_call.1} parent=31 // pred_region
          %s622 = smul.u32 2, %s28
          %s624 = ssub.s32 1024, 1024
          %625 = vsyncadd %s579, %s624
          %s626 = smul.addr %s27, 8
          %s627 = sadd.s32 %s622, %s626
          %s628 = smul.addr %s627, 128
          %s629 = scalar_lea.hbm %s5, %s628
          %s630 = sshll.u32 %s582, 4
          %s631 = int_to_ptr.vmem [resolvable:$true] %s630
          %636 = dma.vmem_to_hbm [thread:$0]  %s631, 1024, %s629, %s579, 256, 256, 16
        $region44: #{tpu_custom_call.1} parent=31 // pred_fallthru
          _
      $region32: #{tpu_custom_call.1} parent=5 // pred_fallthru
        _
      %p637 = scmp.le.s32.totalorder 2, %s18
      // Predicated region
      $region45: #{tpu_custom_call.1} parent=5 // pred_check
        %p638 = pneg %p637
      $region46: #{tpu_custom_call.1} parent=5 // pred_check_branch
        %640 = sbr.rel (%p638) target = $region48
      $region47: #{tpu_custom_call.1} parent=5 // pred_region
        %s641 = ssub.s32 %s18, 2
        // Predicated region
        $region49: #{tpu_custom_call.1} parent=47 // pred_check
          %p642 = pneg %p131
        $region50: #{tpu_custom_call.1} parent=47 // pred_check_branch
          %644 = sbr.rel (%p642) target = $region52
        $region51: #{tpu_custom_call.1} parent=47 // pred_region
          %s645 = sand.u32 %s116, 1
          %s646 = scalar_lea.sflag [#allocation3], %s645
          %s647 = sand.u32 %s116, 1
          %s648 = smul.addr %s647, 64
          %s649 = scalar_lea.vmem [#allocation2], %s648
          %650 = dma.done %s646, 1024
        $region52: #{tpu_custom_call.1} parent=47 // pred_fallthru
          _
        // Predicated region
        $region53: #{tpu_custom_call.1} parent=47 // pred_check
          %p651 = pneg %p159
        $region54: #{tpu_custom_call.1} parent=47 // pred_check_branch
          %653 = sbr.rel (%p651) target = $region56
        $region55: #{tpu_custom_call.1} parent=47 // pred_region
          %s654 = sand.u32 %s24, 1
          %s655 = scalar_lea.sflag [#allocation5], %s654
          %s656 = sand.u32 %s144, 1
          %s657 = smul.addr %s656, 64
          %s658 = scalar_lea.vmem [#allocation4], %s657
          %659 = dma.done %s655, 1024
        $region56: #{tpu_custom_call.1} parent=47 // pred_fallthru
          _
        // Predicated region
        $region57: #{tpu_custom_call.1} parent=47 // pred_check
          %p660 = pneg %p187
        $region58: #{tpu_custom_call.1} parent=47 // pred_check_branch
          %662 = sbr.rel (%p660) target = $region60
        $region59: #{tpu_custom_call.1} parent=47 // pred_region
          %s663 = sand.u32 %s24, 1
          %s664 = scalar_lea.sflag [#allocation5], %s663
          %s665 = sand.u32 %s172, 1
          %s666 = smul.addr %s665, 64
          %s667 = scalar_lea.vmem [#allocation6], %s666
          %668 = dma.done %s664, 1024
        $region60: #{tpu_custom_call.1} parent=47 // pred_fallthru
          _
      $region48: #{tpu_custom_call.1} parent=5 // pred_fallthru
        _
    $region6: #{tpu_custom_call.1} parent=1 // loop_footer
      %s22 = sadd.s32 1, %s18
    $region7: #{tpu_custom_call.1} parent=1 // loop_footer_branch
      %17 = sbr.rel target = $region3
    $region8: #{tpu_custom_call.1} parent=1 // loop_exit
      _
    %669 = vsyncpa [#allocation3], 1
    %s670 = scalar_lea.sflag [#allocation3], 1
    %671 = vsyncpa %s670, 1
    %672 = vsyncpa [#allocation5], 1
    %s673 = scalar_lea.sflag [#allocation5], 1
    %674 = vsyncpa %s673, 1

</llo_original>
